<compile_context>
chip_gen: v5e
topology: v5e:2x2
jax: 0.10.0
libtpu: 0.0.40
codegen_flags: <defaults>
</compile_context>

<pallas_src>
import jax
import jax.numpy as jnp
from jax.experimental import pallas as pl
from jax.experimental.pallas import tpu as pltpu


def _masked_linear_kernel(x_ref, w_ref, m_ref, b_ref, o_ref):
    # x_ref: (TM, K) activation row tile (streamed, double-buffered)
    # w_ref: (K, N)  linear weight transposed to (in, out) — VMEM-resident
    # m_ref: (K, N)  autoregressive mask, same layout as w_ref — VMEM-resident
    # b_ref: (1, N)  bias — VMEM-resident
    w = m_ref[...] * w_ref[...]                                        # VPU, hidden under DMA
    acc = jnp.dot(x_ref[...], w, preferred_element_type=jnp.float32)   # MXU, f32 accumulate
    o_ref[...] = (acc + b_ref[...]).astype(o_ref.dtype)


def _round_up(x, m):
    return (x + m - 1) // m * m


def _choose_row_tile(m, k, n, vmem_budget_bytes=8 * 1024 * 1024):
    """Largest multiple-of-8 row tile whose double-buffered in/out tiles fit a
    conservative VMEM budget (safe on v5e/v6e/v7x scoped defaults)."""
    bytes_per_row = 2 * 4 * (k + n)            # 2-deep buffering, f32
    tm = vmem_budget_bytes // max(bytes_per_row, 1)
    tm = max(8, min(2048, (tm // 8) * 8))      # amortize ~0.35 us/grid-step overhead
    return min(tm, _round_up(m, 8))


def masked_linear(inputs, weight, bias, mask):
    """inputs: (..., K); weight: (N, K); bias: (N,); mask: (N, K) in {0,1}.
    Returns (..., N) = inputs @ (mask * weight).T + bias  (== F.linear(inputs, mask*W, b))."""
    *lead, K = inputs.shape
    N = weight.shape[0]

    x2 = inputs.reshape(-1, K)
    M = x2.shape[0]

    TM = _choose_row_tile(M, K, N)
    M_pad = _round_up(M, TM)
    if M_pad != M:
        x2 = jnp.pad(x2, ((0, M_pad - M), (0, 0)))   # pad rows; sliced off below

    w_t = jnp.transpose(weight)                      # (K, N)
    m_t = jnp.transpose(mask.astype(weight.dtype))   # (K, N)
    b2 = bias.reshape(1, N)

    out = pl.pallas_call(
        _masked_linear_kernel,
        out_shape=jax.ShapeDtypeStruct((M_pad, N), inputs.dtype),
        grid_spec=pltpu.PrefetchScalarGridSpec(
            num_scalar_prefetch=0,
            grid=(M_pad // TM,),
            in_specs=[
                pl.BlockSpec((TM, K), lambda i: (i, 0)),   # streamed row tiles
                pl.BlockSpec((K, N), lambda i: (0, 0)),    # weight: VMEM-resident
                pl.BlockSpec((K, N), lambda i: (0, 0)),    # mask:   VMEM-resident
                pl.BlockSpec((1, N), lambda i: (0, 0)),    # bias:   VMEM-resident
            ],
            out_specs=pl.BlockSpec((TM, N), lambda i: (i, 0)),
        ),
        compiler_params=pltpu.CompilerParams(
            dimension_semantics=("parallel",),             # v7x: shard tiles over 2 TCs
        ),
    )(x2, w_t, m_t, b2)

    out = out[:M]
    return out.reshape(*lead, N)


if __name__ == "__main__":
    key = jax.random.PRNGKey(0)
    k_x, k_w, k_b = jax.random.split(key, 3)

    # MaskedLinear(input_degrees, output_degrees):
    #   num_input_channels = 32, num_output_channels = 48
    num_in, num_out = 32, 48
    input_degrees = (jnp.arange(num_in) % 8) + 1        # (32,)
    output_degrees = (jnp.arange(num_out) % 8) + 1      # (48,)
    mask = (output_degrees[:, None] >= input_degrees[None, :]).astype(jnp.float32)  # (48, 32)

    # nn.Linear(num_in, num_out) parameters — deterministic init
    weight = jax.random.normal(k_w, (num_out, num_in), dtype=jnp.float32) / jnp.sqrt(
        jnp.float32(num_in)
    )
    bias = jax.random.normal(k_b, (num_out,), dtype=jnp.float32) * 0.1

    # inputs: batch=2, seq=8, hidden=32
    x = jax.random.normal(k_x, (2, 8, num_in), dtype=jnp.float32)

    out = masked_linear(x, weight, bias, mask)
    out = jax.block_until_ready(out)

    # pure-JAX reference
    ref = jnp.einsum("...k,nk->...n", x, mask * weight) + bias
    assert out.shape == (2, 8, num_out), out.shape
    assert jnp.allclose(out, ref, atol=1e-4, rtol=1e-4), float(jnp.max(jnp.abs(out - ref)))

    print("KERNEL_OK")
</pallas_src>

<mosaic_0001>
module attributes {stable_mosaic.version = 11 : i64} {
  func.func @_masked_linear_kernel(%arg0: i32, %arg1: memref<16x32xf32, #tpu.memory_space<vmem>>, %arg2: memref<32x48xf32, #tpu.memory_space<vmem>>, %arg3: memref<32x48xf32, #tpu.memory_space<vmem>>, %arg4: memref<1x48xf32, #tpu.memory_space<vmem>>, %arg5: memref<16x48xf32, #tpu.memory_space<vmem>>) attributes {dimension_semantics = [#tpu.dimension_semantics<parallel>], iteration_bounds = array<i64: 1>, scalar_prefetch = 0 : i64, scratch_operands = 0 : i64, tpu.core_type = #tpu.core_type<tc>, window_params = [{transform_indices = @transform_0, window_bounds = array<i64: 16, 32>}, {pipeline_mode = #tpu.pipeline_mode<synchronous>, transform_indices = @transform_1, window_bounds = array<i64: 32, 48>}, {pipeline_mode = #tpu.pipeline_mode<synchronous>, transform_indices = @transform_2, window_bounds = array<i64: 32, 48>}, {pipeline_mode = #tpu.pipeline_mode<synchronous>, transform_indices = @transform_3, window_bounds = array<i64: 1, 48>}, {transform_indices = @transform_4, window_bounds = array<i64: 16, 48>}]} {
    %c0 = arith.constant 0 : index
    %c0_0 = arith.constant 0 : index
    %0 = vector.load %arg3[%c0, %c0_0] : memref<32x48xf32, #tpu.memory_space<vmem>>, vector<32x48xf32>
    %c0_1 = arith.constant 0 : index
    %c0_2 = arith.constant 0 : index
    %1 = vector.load %arg2[%c0_1, %c0_2] : memref<32x48xf32, #tpu.memory_space<vmem>>, vector<32x48xf32>
    %2 = arith.mulf %0, %1 : vector<32x48xf32>
    %c0_3 = arith.constant 0 : index
    %c0_4 = arith.constant 0 : index
    %3 = vector.load %arg1[%c0_3, %c0_4] : memref<16x32xf32, #tpu.memory_space<vmem>>, vector<16x32xf32>
    %cst = arith.constant dense<0.000000e+00> : vector<16x48xf32>
    %4 = tpu.matmul %3, %2, %cst {dimension_numbers = #tpu.dot_dimension_numbers<[1], [0], [0], [1], [0, 0, 1, 1], [], []>} : vector<16x32xf32>, vector<32x48xf32>, vector<16x48xf32> -> vector<16x48xf32>
    %c0_5 = arith.constant 0 : index
    %c0_6 = arith.constant 0 : index
    %5 = vector.load %arg4[%c0_5, %c0_6] : memref<1x48xf32, #tpu.memory_space<vmem>>, vector<1x48xf32>
    %6 = vector.broadcast %5 : vector<1x48xf32> to vector<16x48xf32>
    %7 = arith.addf %4, %6 : vector<16x48xf32>
    %c0_7 = arith.constant 0 : index
    %c0_8 = arith.constant 0 : index
    %8 = vector.load %arg5[%c0_7, %c0_8] : memref<16x48xf32, #tpu.memory_space<vmem>>, vector<16x48xf32>
    tpu.vector_store %arg5[%c0_7, %c0_8], %7 {strides = array<i32>} : memref<16x48xf32, #tpu.memory_space<vmem>>, vector<16x48xf32>,
    return
  }
  func.func @transform_0(%arg0: i32) -> (i32, i32) {
    %c0_i32 = arith.constant 0 : i32
    %c0_i32_0 = arith.constant 0 : i32
    return %arg0, %c0_i32 : i32, i32
  }
  func.func @transform_1(%arg0: i32) -> (i32, i32) {
    %c0_i32 = arith.constant 0 : i32
    %c0_i32_0 = arith.constant 0 : i32
    %c0_i32_1 = arith.constant 0 : i32
    return %c0_i32, %c0_i32_0 : i32, i32
  }
  func.func @transform_2(%arg0: i32) -> (i32, i32) {
    %c0_i32 = arith.constant 0 : i32
    %c0_i32_0 = arith.constant 0 : i32
    %c0_i32_1 = arith.constant 0 : i32
    return %c0_i32, %c0_i32_0 : i32, i32
  }
  func.func @transform_3(%arg0: i32) -> (i32, i32) {
    %c0_i32 = arith.constant 0 : i32
    %c0_i32_0 = arith.constant 0 : i32
    %c0_i32_1 = arith.constant 0 : i32
    return %c0_i32, %c0_i32_0 : i32, i32
  }
  func.func @transform_4(%arg0: i32) -> (i32, i32) {
    %c0_i32 = arith.constant 0 : i32
    %c0_i32_0 = arith.constant 0 : i32
    return %arg0, %c0_i32 : i32, i32
  }
}

</mosaic_0001>

<llo_original>
// kernel: tpu_custom_call.1
$region0: #{tpu_custom_call.1}
  #allocation0 [shape = 'u32[]', space=smem, size = 0x4, offset = 0x4, fixed_abs, tag = 'smem constant byte address 0x4 - core index']
  #allocation1 [shape = 'u32[72,128]{1,0:T(1,128)}', space=vmem, size = 0x9000, scoped, tag = 'internal scratch']
  %s0 = inlined_call_operand.hbm [shape: f32[16,32], index: 0, kind: input, shape index: {}]
  %s1 = inlined_call_operand.hbm [shape: f32[32,48], index: 1, kind: input, shape index: {}]
  %s2 = inlined_call_operand.hbm [shape: f32[32,48], index: 2, kind: input, shape index: {}]
  %s3 = inlined_call_operand.vmem [shape: f32[1,48], index: 3, kind: input, shape index: {}]
  %s4 = inlined_call_operand.hbm [shape: f32[16,48], index: 4, kind: output, shape index: {}]
  %s5 = sld [smem:[#allocation0]]
  $region38: #{tpu_custom_call.1} parent=0
    _
  %s7 = ssub.s32 1, %s5
  %s8 = scalar_select 0, %s7, %s5
  $region1: #{tpu_custom_call.1} parent=0
    #allocation2 [shape = 'u8[8192]{0}', space=vmem, size = 0x2000, scoped, tag = 'input window, operand 0, single buffered']
    #allocation3 [shape = 's32[1]{0}', space=sflag, size = 0x4, scoped, tag = 'scoped memory for tpu_custom_call.1']
    #allocation4 [shape = 's32[1]{0}', space=sflag, size = 0x4, scoped, tag = 'scoped memory for tpu_custom_call.1']
    #allocation5 [shape = 'u8[16384]{0}', space=vmem, size = 0x4000, scoped, tag = 'input window, operand 1, single buffered']
    #allocation6 [shape = 's32[1]{0}', space=sflag, size = 0x4, scoped, tag = 'scoped memory for tpu_custom_call.1']
    #allocation7 [shape = 'u8[16384]{0}', space=vmem, size = 0x4000, scoped, tag = 'input window, operand 2, single buffered']
    #allocation8 [shape = 'u8[8192]{0}', space=vmem, size = 0x2000, scoped, tag = 'output window, operand 0, single buffered']
    %9 = vsyncpa [#allocation3], 0
    %10 = vsyncpa [#allocation6], 0
    %11 = vsyncpa [#allocation4], 0
    // Predicated region
    $region2: #{tpu_custom_call.1} parent=1 // pred_check
      _
    $region3: #{tpu_custom_call.1} parent=1 // pred_check_branch
      %13 = sbr.rel (0) target = $region5
    $region4: #{tpu_custom_call.1} parent=1 // pred_region
      %15 = vsyncadd [#allocation3], 0
      %s16 = sshll.u32 %s0, 4
      %s17 = int_to_ptr.hbm [resolvable:$true] %s16
      %s18 = sshll.u32 [#allocation2], 4
      %s19 = int_to_ptr.vmem [resolvable:$true] %s18
      %24 = dma.hbm_to_vmem [thread:$0]  %s17, 256, %s19, [#allocation3], 128, 128, 8
    $region5: #{tpu_custom_call.1} parent=1 // pred_fallthru
      _
    // Predicated region
    $region6: #{tpu_custom_call.1} parent=1 // pred_check
      _
    $region7: #{tpu_custom_call.1} parent=1 // pred_check_branch
      %26 = sbr.rel (0) target = $region9
    $region8: #{tpu_custom_call.1} parent=1 // pred_region
      %28 = vsyncadd [#allocation6], 0
      %s29 = sshll.u32 %s1, 4
      %s30 = int_to_ptr.hbm [resolvable:$true] %s29
      %s31 = sshll.u32 [#allocation5], 4
      %s32 = int_to_ptr.vmem [resolvable:$true] %s31
      %37 = dma.hbm_to_vmem [thread:$0]  %s30, 512, %s32, [#allocation6], 128, 128, 8
    $region9: #{tpu_custom_call.1} parent=1 // pred_fallthru
      _
    // Predicated region
    $region10: #{tpu_custom_call.1} parent=1 // pred_check
      _
    $region11: #{tpu_custom_call.1} parent=1 // pred_check_branch
      %39 = sbr.rel (0) target = $region13
    $region12: #{tpu_custom_call.1} parent=1 // pred_region
      %41 = vsyncadd [#allocation6], 0
      %s42 = sshll.u32 %s2, 4
      %s43 = int_to_ptr.hbm [resolvable:$true] %s42
      %s44 = sshll.u32 [#allocation7], 4
      %s45 = int_to_ptr.vmem [resolvable:$true] %s44
      %50 = dma.hbm_to_vmem [thread:$0]  %s43, 512, %s45, [#allocation6], 128, 128, 8
    $region13: #{tpu_custom_call.1} parent=1 // pred_fallthru
      _
    // Predicated region
    $region14: #{tpu_custom_call.1} parent=1 // pred_check
      _
    $region15: #{tpu_custom_call.1} parent=1 // pred_check_branch
      %52 = sbr.rel (0) target = $region17
    $region16: #{tpu_custom_call.1} parent=1 // pred_region
      _
    $region17: #{tpu_custom_call.1} parent=1 // pred_fallthru
      _
    // Predicated region
    $region18: #{tpu_custom_call.1} parent=1 // pred_check
      _
    $region19: #{tpu_custom_call.1} parent=1 // pred_check_branch
      %54 = sbr.rel (0) target = $region21
    $region20: #{tpu_custom_call.1} parent=1 // pred_region
      %56 = dma.done [#allocation3], 256
    $region21: #{tpu_custom_call.1} parent=1 // pred_fallthru
      _
    // Predicated region
    $region22: #{tpu_custom_call.1} parent=1 // pred_check
      _
    $region23: #{tpu_custom_call.1} parent=1 // pred_check_branch
      %58 = sbr.rel (0) target = $region25
    $region24: #{tpu_custom_call.1} parent=1 // pred_region
      %60 = dma.done [#allocation6], 512
    $region25: #{tpu_custom_call.1} parent=1 // pred_fallthru
      _
    // Predicated region
    $region26: #{tpu_custom_call.1} parent=1 // pred_check
      _
    $region27: #{tpu_custom_call.1} parent=1 // pred_check_branch
      %62 = sbr.rel (0) target = $region29
    $region28: #{tpu_custom_call.1} parent=1 // pred_region
      %64 = dma.done [#allocation6], 512
    $region29: #{tpu_custom_call.1} parent=1 // pred_fallthru
      _
    %v65 = vld [vmem:[#allocation7] sm:$0xff]
    %v66 = vld [vmem:[#allocation7 + $0x8] sm:$0xff]
    %v67 = vld [vmem:[#allocation7 + $0x10] sm:$0xff]
    %v68 = vld [vmem:[#allocation7 + $0x18] sm:$0xff]
    %v69 = vld [vmem:[#allocation5] sm:$0xff]
    %v70 = vld [vmem:[#allocation5 + $0x8] sm:$0xff]
    %v71 = vld [vmem:[#allocation5 + $0x10] sm:$0xff]
    %v72 = vld [vmem:[#allocation5 + $0x18] sm:$0xff]
    %v73 = vmul.f32 %v65, %v69
    %v74 = vmul.f32 %v66, %v70
    %v75 = vmul.f32 %v67, %v71
    %v76 = vmul.f32 %v68, %v72
    %v77 = vld [vmem:[#allocation2] sm:$0xff]
    %v78 = vld [vmem:[#allocation2 + $0x8] sm:$0xff]
    %v79 = vld [vmem:[%s3] sm:$0x1]
    %v81 = vperm.slane %v79, 0
    %vm83 = vcmask 261120
    %v85 = vsel %vm83, %v77, 0
    %v88 = vsel %vm83, %v78, 0
    %90 = vmatpush.msra.mxu0 0.0
    %91 = vmatpush.msra.mxu0 0.0
    %92 = vmatpush.msra.mxu0 0.0
    %93 = vmatpush.msra.mxu0 0.0
    %94 = vmatpush.msra.mxu0 0.0
    %95 = vmatpush.msra.mxu0 0.0
    %96 = vmatpush.msra.mxu0 0.0
    %97 = vmatpush.msra.mxu0 0.0
    %98 = vmatpush.msra.mxu0 0.0
    %99 = vmatpush.msra.mxu0 0.0
    %100 = vmatpush.msra.mxu0 0.0
    %101 = vmatpush.msra.mxu0 0.0
    %102 = vmatpush.msra.mxu0 %v76
    %103 = vmatpush.msra.mxu0 %v75
    %104 = vmatpush.msra.mxu0 %v74
    %105 = vmatpush.msra.mxu0 %v73
    %106 = vmatmul.f32.gmra.mxu0 %v85
    %v107 = vpop.f32.mrf.mxu0
    %v108 = vadd.f32 %v81, %v107
    %109 = vmatmul.f32.gmra.mxu0 %v88
    %v110 = vpop.f32.mrf.mxu0
    %v111 = vadd.f32 %v81, %v110
    %112 = vdwg.mxu0
    %vm113 = vcmask 392192
    %114 = vst.msk [vmem:[#allocation8] sm:$0xff] %vm113, %v108
    %115 = vst.msk [vmem:[#allocation8 + $0x8] sm:$0xff] %vm113, %v111
    // Predicated region
    $region30: #{tpu_custom_call.1} parent=1 // pred_check
      _
    $region31: #{tpu_custom_call.1} parent=1 // pred_check_branch
      %117 = sbr.rel (0) target = $region33
    $region32: #{tpu_custom_call.1} parent=1 // pred_region
      %119 = vsyncadd [#allocation4], 0
      %s120 = sshll.u32 [#allocation8], 4
      %s121 = int_to_ptr.vmem [resolvable:$true] %s120
      %s122 = sshll.u32 %s4, 4
      %s123 = int_to_ptr.hbm [resolvable:$true] %s122
      %128 = dma.vmem_to_hbm [thread:$0]  %s121, 256, %s123, [#allocation4], 128, 128, 8
    $region33: #{tpu_custom_call.1} parent=1 // pred_fallthru
      _
    // Predicated region
    $region34: #{tpu_custom_call.1} parent=1 // pred_check
      _
    $region35: #{tpu_custom_call.1} parent=1 // pred_check_branch
      %130 = sbr.rel (0) target = $region37
    $region36: #{tpu_custom_call.1} parent=1 // pred_region
      %132 = dma.done [#allocation4], 256
    $region37: #{tpu_custom_call.1} parent=1 // pred_fallthru
      _
    %133 = vsyncpa [#allocation3], 1
    %134 = vsyncpa [#allocation6], 1
    %135 = vsyncpa [#allocation4], 1

</llo_original>
